<compile_context>
chip_gen: v7x
topology: tpu7x:2x2x1
jax: 0.10.0
libtpu: 0.0.40
codegen_flags: <defaults>
</compile_context>

<pallas_src>
import functools

import jax
import jax.numpy as jnp
from jax.experimental import pallas as pl
from jax.experimental.pallas import tpu as pltpu


def _actor_logprob_kernel(h_ref, w_ref, lab_ref, out_ref,
                          col_sc, m_sc, l_sc, g_sc):
    """Fused logits = h_aug @ W_aug (bias folded), online log-softmax, gather.

    Grid: (cdiv(N, tn), V // tv); axis 0 = row blocks ("parallel"),
    axis 1 = vocab blocks ("arbitrary" reduction, innermost).

    h_ref  : [tn, H+1] bf16 row block (ones column folds the bias), resident
             across the vocab loop.
    w_ref  : [H+1, tv] bf16 vocab slice of the augmented LM head weight.
    lab_ref: [tn, 1]   int32 next-token labels.
    out_ref: [tn, 1]   f32 log p(label | context).
    """
    j = pl.program_id(1)
    tv = w_ref.shape[-1]

    @pl.when(j == 0)
    def _():
        m_sc[...] = jnp.full_like(m_sc, -jnp.inf)
        l_sc[...] = jnp.zeros_like(l_sc)
        g_sc[...] = jnp.zeros_like(g_sc)
        # Block-local column indices, materialized once per row block.
        col_sc[...] = jax.lax.broadcasted_iota(jnp.int32, col_sc.shape, 1)

    # Logits for this vocab block (bf16 operands, f32 MXU accumulate). The
    # bias comes in through the ones column of h_ref, so no VPU add here.
    s = jnp.dot(h_ref[...], w_ref[...], preferred_element_type=jnp.float32)

    # Gather the logit of the label token if it falls in this vocab block.
    local_lab = lab_ref[...] - j * tv                       # [tn, 1]
    match = col_sc[...] == local_lab                        # [1,tv]x[tn,1]->[tn,tv]
    g_sc[...] += jnp.sum(jnp.where(match, s, 0.0), axis=-1, keepdims=True)

    # Online logsumexp over the vocab axis.
    m_new = jnp.maximum(m_sc[...], jnp.max(s, axis=-1, keepdims=True))
    l_sc[...] = (jnp.exp(m_sc[...] - m_new) * l_sc[...]
                 + jnp.sum(jnp.exp(s - m_new), axis=-1, keepdims=True))
    m_sc[...] = m_new

    @pl.when(j == pl.num_programs(1) - 1)
    def _():
        # log_softmax(logits)[label] = logit[label] - logsumexp(logits)
        out_ref[...] = g_sc[...] - (m_sc[...] + jnp.log(l_sc[...]))


def _vmem_capacity_bytes():
    """Per-core VMEM capacity; conservative (v7x, 64 MiB) fallback."""
    try:
        info = pltpu.get_tpu_info()
        cap = getattr(info, "vmem_capacity_bytes", None)
        if cap:
            return int(cap)
    except Exception:
        pass
    return 64 << 20


def _select_tiles(N, Haug, V, vmem_ceiling):
    """Pick (tn, tv) so the double-buffered working set fits vmem_ceiling."""
    # Vocab tile: largest lane-aligned divisor of V from the preferred set.
    tv = V
    for cand in (1024, 512, 256, 128):
        if cand <= V and V % cand == 0:
            tv = cand
            break

    # Row tile: W is re-streamed N/tn times, so bigger tn -> higher arithmetic
    # intensity.  v5e/v6e (128 MiB VMEM) can afford 1024; v7x (64 MiB) gets 512.
    desired_tn = 1024 if vmem_ceiling >= (80 << 20) else 512
    tn = N if N <= desired_tn else desired_tn

    # Keep >=2 row blocks when N is large so a v7x megacore can shard rows.
    if tn >= N and N >= 512:
        tn = ((N + 1) // 2 + 7) // 8 * 8

    def est(tn_, tv_):
        return (2 * tn_ * Haug * 2      # hidden block (bf16, double-buffered)
                + 2 * Haug * tv_ * 2    # W slice (bf16, double-buffered)
                + 2 * tn_ * 4           # labels
                + 2 * tn_ * 4           # output
                + tv_ * 4               # iota scratch
                + 3 * tn_ * 4)          # m / l / g scratch

    # Shrink until the pipelined working set fits the per-core VMEM budget.
    while est(tn, tv) > vmem_ceiling:
        if tv > 512 and V % (tv // 2) == 0:
            tv //= 2
        elif tn > 256:
            tn //= 2
        elif tv > 128 and V % (tv // 2) == 0:
            tv //= 2
        elif tn > 8:
            tn //= 2
        else:
            break

    # Row tile must be sublane-aligned unless it spans all rows.
    if tn < N:
        tn = max(8, (tn // 8) * 8)
    return tn, tv, est(tn, tv)


def _log_probs_pallas(hidden_aug, w_aug, labels):
    """hidden_aug [N, H+1] bf16, w_aug [H+1, V] bf16, labels [N] i32 -> [N] f32."""
    N, Haug = hidden_aug.shape
    V = w_aug.shape[1]

    vmem_ceiling = int(_vmem_capacity_bytes() * 0.8)   # headroom for Mosaic
    tn, tv, est = _select_tiles(N, Haug, V, vmem_ceiling)
    grid = (pl.cdiv(N, tn), V // tv)

    lab = labels.reshape(N, 1).astype(jnp.int32)
    vmem_limit = int(min(vmem_ceiling, max(32 << 20, 2 * est)))

    out = pl.pallas_call(
        _actor_logprob_kernel,
        out_shape=jax.ShapeDtypeStruct((N, 1), jnp.float32),
        grid_spec=pltpu.PrefetchScalarGridSpec(
            num_scalar_prefetch=0,
            grid=grid,
            in_specs=[
                # hidden (with ones column): resident across the vocab loop
                pl.BlockSpec((tn, Haug), lambda i, j: (i, 0)),
                # augmented W vocab slice (streamed reduction operand)
                pl.BlockSpec((Haug, tv), lambda i, j: (0, j)),
                # labels: resident across the vocab loop
                pl.BlockSpec((tn, 1), lambda i, j: (i, 0)),
            ],
            out_specs=pl.BlockSpec((tn, 1), lambda i, j: (i, 0)),
            scratch_shapes=[
                pltpu.VMEM((1, tv), jnp.int32),    # block-local column iota
                pltpu.VMEM((tn, 1), jnp.float32),  # running max
                pltpu.VMEM((tn, 1), jnp.float32),  # running sum-exp
                pltpu.VMEM((tn, 1), jnp.float32),  # gathered label logit
            ],
        ),
        compiler_params=pltpu.CompilerParams(
            dimension_semantics=("parallel", "arbitrary"),
            vmem_limit_bytes=vmem_limit),
    )(hidden_aug, w_aug, lab)
    return out.reshape(N)


def init_params(key, vocab_size, hidden_size):
    """f32 master parameters of the synthetic tiny-LM base model."""
    k_emb, k_w, k_b = jax.random.split(key, 3)
    return {
        "embedding": jax.random.normal(k_emb, (vocab_size, hidden_size),
                                       jnp.float32) * 0.02,
        "w_head": jax.random.normal(k_w, (hidden_size, vocab_size),
                                    jnp.float32) * 0.02,
        "b_head": jax.random.normal(k_b, (vocab_size,), jnp.float32) * 0.02,
    }


def prepare_actor_params(params):
    """One-time (outside jit) bf16 cast + bias fold.

    Removes the per-forward f32->bf16 cast of the full [H, V] head (an entire
    extra W streaming pass of HBM traffic) and folds the bias into an extra W
    row so the kernel needs no per-element bias add.
    """
    w_aug = jnp.concatenate(
        [params["w_head"], params["b_head"][None, :]], axis=0)   # [H+1, V]
    return {
        "embedding": params["embedding"].astype(jnp.bfloat16),
        "w_head_aug": w_aug.astype(jnp.bfloat16),
    }


@functools.partial(jax.jit, static_argnames=("num_actions",))
def actor_forward(prepared_params, sequences, num_actions, attention_mask=None):
    """Actor.forward: returns action log-probs, shape [B, num_actions].

    sequences: int32 [B, S]; attention_mask: optional [B, S].
    """
    # TODO(synk): attention_mask is unused by the synthetic embedding+LM-head
    # base model (a full transformer base model would consume it).
    del attention_mask
    B, S = sequences.shape
    na = min(num_actions, S - 1)

    # Only the last `na` positions are returned, and log-softmax + gather is
    # independent per position, so slice BEFORE the heavy LM-head kernel
    # (N = B*na instead of B*(S-1)).  For this non-attention base model the
    # hidden state at position t depends only on token t, so this is exact.
    ctx_tokens = sequences[:, S - 1 - na:S - 1]               # [B, na]
    labels = sequences[:, S - na:]                            # [B, na]

    emb = prepared_params["embedding"][ctx_tokens]            # [B, na, H] bf16
    H = emb.shape[-1]
    N = B * na
    hidden = emb.reshape(N, H)
    # Ones column folds the LM-head bias into the MXU matmul.
    hidden_aug = jnp.concatenate(
        [hidden, jnp.ones((N, 1), hidden.dtype)], axis=-1)    # [N, H+1]

    log_probs = _log_probs_pallas(hidden_aug,
                                  prepared_params["w_head_aug"],
                                  labels.reshape(N))          # [N]
    return log_probs.reshape(B, na)


def _reference_forward(params, sequences, num_actions):
    """Pure-JAX f32 reference of the same forward pass (full, unsliced)."""
    emb = params["embedding"][sequences]                      # [B, S, H]
    logits = emb @ params["w_head"] + params["b_head"]        # [B, S, V]
    logp = jax.nn.log_softmax(logits[:, :-1, :], axis=-1)
    lab = sequences[:, 1:]
    gathered = jnp.take_along_axis(logp, lab[..., None], axis=-1)[..., 0]
    return gathered[:, -num_actions:]


if __name__ == "__main__":
    B, S, H, V = 2, 8, 32, 256
    num_actions = 5

    key = jax.random.PRNGKey(0)
    k_params, k_seq = jax.random.split(key)
    params = init_params(k_params, V, H)
    prepared = prepare_actor_params(params)            # one-time bf16 + bias fold
    sequences = jax.random.randint(k_seq, (B, S), 0, V, dtype=jnp.int32)
    attention_mask = jnp.ones((B, S), jnp.int32)

    out = actor_forward(prepared, sequences, num_actions,
                        attention_mask=attention_mask)
    out = jax.block_until_ready(out)

    ref = _reference_forward(params, sequences, num_actions)
    assert out.shape == (B, num_actions), out.shape
    # bf16 streamed operands (f32 MXU accumulate) vs. f32 reference.
    max_err = float(jnp.max(jnp.abs(out - ref)))
    assert jnp.allclose(out, ref, atol=2e-2, rtol=2e-2), (
        f"mismatch: max abs err {max_err}")

    print("KERNEL_OK")
</pallas_src>

<mosaic_0001>
module attributes {stable_mosaic.version = 11 : i64} {
  func.func @_actor_logprob_kernel(%arg0: i32, %arg1: i32, %arg2: memref<10x33xbf16, #tpu.memory_space<vmem>>, %arg3: memref<33x256xbf16, #tpu.memory_space<vmem>>, %arg4: memref<10x1xi32, #tpu.memory_space<vmem>>, %arg5: memref<10x1xf32, #tpu.memory_space<vmem>>, %arg6: memref<1x256xi32, #tpu.memory_space<vmem>>, %arg7: memref<10x1xf32, #tpu.memory_space<vmem>>, %arg8: memref<10x1xf32, #tpu.memory_space<vmem>>, %arg9: memref<10x1xf32, #tpu.memory_space<vmem>>) attributes {dimension_semantics = [#tpu.dimension_semantics<parallel>, #tpu.dimension_semantics<arbitrary>], iteration_bounds = array<i64: 1, 1>, scalar_prefetch = 0 : i64, scratch_operands = 4 : i64, tpu.core_type = #tpu.core_type<tc>, window_params = [{transform_indices = @transform_0, window_bounds = array<i64: 10, 33>}, {transform_indices = @transform_1, window_bounds = array<i64: 33, 256>}, {transform_indices = @transform_2, window_bounds = array<i64: 10, 1>}, {transform_indices = @transform_3, window_bounds = array<i64: 10, 1>}]} {
    %c0_i32 = arith.constant 0 : i32
    %0 = arith.cmpi eq, %arg1, %c0_i32 : i32
    %1 = arith.extui %0 : i1 to i32
    %c0_i32_0 = arith.constant 0 : i32
    %2 = arith.cmpi ne, %1, %c0_i32_0 : i32
    scf.if %2 {
      %cst_28 = arith.constant 0xFF800000 : f32
      %41 = vector.broadcast %cst_28 : f32 to vector<10x1xf32>
      %c0_29 = arith.constant 0 : index
      %c0_30 = arith.constant 0 : index
      %42 = vector.load %arg7[%c0_29, %c0_30] : memref<10x1xf32, #tpu.memory_space<vmem>>, vector<10x1xf32>
      tpu.vector_store %arg7[%c0_29, %c0_30], %41 {strides = array<i32>} : memref<10x1xf32, #tpu.memory_space<vmem>>, vector<10x1xf32>,
      %cst_31 = arith.constant 0.000000e+00 : f32
      %43 = vector.broadcast %cst_31 : f32 to vector<10x1xf32>
      %c0_32 = arith.constant 0 : index
      %c0_33 = arith.constant 0 : index
      %44 = vector.load %arg8[%c0_32, %c0_33] : memref<10x1xf32, #tpu.memory_space<vmem>>, vector<10x1xf32>
      tpu.vector_store %arg8[%c0_32, %c0_33], %43 {strides = array<i32>} : memref<10x1xf32, #tpu.memory_space<vmem>>, vector<10x1xf32>,
      %cst_34 = arith.constant 0.000000e+00 : f32
      %45 = vector.broadcast %cst_34 : f32 to vector<10x1xf32>
      %c0_35 = arith.constant 0 : index
      %c0_36 = arith.constant 0 : index
      %46 = vector.load %arg9[%c0_35, %c0_36] : memref<10x1xf32, #tpu.memory_space<vmem>>, vector<10x1xf32>
      tpu.vector_store %arg9[%c0_35, %c0_36], %45 {strides = array<i32>} : memref<10x1xf32, #tpu.memory_space<vmem>>, vector<10x1xf32>,
      %47 = tpu.iota {dimensions = array<i32: 1>} : vector<1x256xi32>
      %c0_37 = arith.constant 0 : index
      %c0_38 = arith.constant 0 : index
      %48 = vector.load %arg6[%c0_37, %c0_38] : memref<1x256xi32, #tpu.memory_space<vmem>>, vector<1x256xi32>
      tpu.vector_store %arg6[%c0_37, %c0_38], %47 {strides = array<i32>} : memref<1x256xi32, #tpu.memory_space<vmem>>, vector<1x256xi32>,
    } else {
    }
    %c0 = arith.constant 0 : index
    %c0_1 = arith.constant 0 : index
    %3 = vector.load %arg2[%c0, %c0_1] : memref<10x33xbf16, #tpu.memory_space<vmem>>, vector<10x33xbf16>
    %c0_2 = arith.constant 0 : index
    %c0_3 = arith.constant 0 : index
    %4 = vector.load %arg3[%c0_2, %c0_3] : memref<33x256xbf16, #tpu.memory_space<vmem>>, vector<33x256xbf16>
    %cst = arith.constant dense<0.000000e+00> : vector<10x256xf32>
    %5 = tpu.matmul %3, %4, %cst {dimension_numbers = #tpu.dot_dimension_numbers<[1], [0], [0], [1], [0, 0, 1, 1], [], []>} : vector<10x33xbf16>, vector<33x256xbf16>, vector<10x256xf32> -> vector<10x256xf32>
    %c0_4 = arith.constant 0 : index
    %c0_5 = arith.constant 0 : index
    %6 = vector.load %arg4[%c0_4, %c0_5] : memref<10x1xi32, #tpu.memory_space<vmem>>, vector<10x1xi32>
    %c256_i32 = arith.constant 256 : i32
    %7 = arith.muli %arg1, %c256_i32 : i32
    %8 = vector.broadcast %7 : i32 to vector<10x1xi32>
    %9 = arith.subi %6, %8 : vector<10x1xi32>
    %c0_6 = arith.constant 0 : index
    %c0_7 = arith.constant 0 : index
    %10 = vector.load %arg6[%c0_6, %c0_7] : memref<1x256xi32, #tpu.memory_space<vmem>>, vector<1x256xi32>
    %11 = vector.broadcast %10 : vector<1x256xi32> to vector<10x256xi32>
    %12 = vector.broadcast %9 : vector<10x1xi32> to vector<10x256xi32>
    %13 = arith.cmpi eq, %11, %12 : vector<10x256xi32>
    %c0_8 = arith.constant 0 : index
    %c0_9 = arith.constant 0 : index
    %14 = vector.load %arg9[%c0_8, %c0_9] : memref<10x1xf32, #tpu.memory_space<vmem>>, vector<10x1xf32>
    %cst_10 = arith.constant 0.000000e+00 : f32
    %15 = vector.broadcast %cst_10 : f32 to vector<10x256xf32>
    %16 = arith.select %13, %5, %15 : vector<10x256xi1>, vector<10x256xf32>
    %cst_11 = arith.constant dense<0.000000e+00> : vector<10xf32>
    %17 = vector.multi_reduction <add>, %16, %cst_11 [1] : vector<10x256xf32> to vector<10xf32>
    %18 = vector.shape_cast %17 : vector<10xf32> to vector<10x1xf32>
    %19 = arith.addf %14, %18 : vector<10x1xf32>
    %c0_12 = arith.constant 0 : index
    %c0_13 = arith.constant 0 : index
    %20 = vector.load %arg9[%c0_12, %c0_13] : memref<10x1xf32, #tpu.memory_space<vmem>>, vector<10x1xf32>
    tpu.vector_store %arg9[%c0_12, %c0_13], %19 {strides = array<i32>} : memref<10x1xf32, #tpu.memory_space<vmem>>, vector<10x1xf32>,
    %c0_14 = arith.constant 0 : index
    %c0_15 = arith.constant 0 : index
    %21 = vector.load %arg7[%c0_14, %c0_15] : memref<10x1xf32, #tpu.memory_space<vmem>>, vector<10x1xf32>
    %cst_16 = arith.constant dense<0xFF800000> : vector<10xf32>
    %22 = vector.multi_reduction <maximumf>, %5, %cst_16 [1] : vector<10x256xf32> to vector<10xf32>
    %23 = vector.shape_cast %22 : vector<10xf32> to vector<10x1xf32>
    %24 = arith.maximumf %21, %23 : vector<10x1xf32>
    %c0_17 = arith.constant 0 : index
    %c0_18 = arith.constant 0 : index
    %25 = vector.load %arg7[%c0_17, %c0_18] : memref<10x1xf32, #tpu.memory_space<vmem>>, vector<10x1xf32>
    %26 = arith.subf %25, %24 : vector<10x1xf32>
    %27 = math.exp %26 : vector<10x1xf32>
    %c0_19 = arith.constant 0 : index
    %c0_20 = arith.constant 0 : index
    %28 = vector.load %arg8[%c0_19, %c0_20] : memref<10x1xf32, #tpu.memory_space<vmem>>, vector<10x1xf32>
    %29 = arith.mulf %27, %28 : vector<10x1xf32>
    %30 = vector.broadcast %24 : vector<10x1xf32> to vector<10x256xf32>
    %31 = arith.subf %5, %30 : vector<10x256xf32>
    %32 = math.exp %31 : vector<10x256xf32>
    %cst_21 = arith.constant dense<0.000000e+00> : vector<10xf32>
    %33 = vector.multi_reduction <add>, %32, %cst_21 [1] : vector<10x256xf32> to vector<10xf32>
    %34 = vector.shape_cast %33 : vector<10xf32> to vector<10x1xf32>
    %35 = arith.addf %29, %34 : vector<10x1xf32>
    %c0_22 = arith.constant 0 : index
    %c0_23 = arith.constant 0 : index
    %36 = vector.load %arg8[%c0_22, %c0_23] : memref<10x1xf32, #tpu.memory_space<vmem>>, vector<10x1xf32>
    tpu.vector_store %arg8[%c0_22, %c0_23], %35 {strides = array<i32>} : memref<10x1xf32, #tpu.memory_space<vmem>>, vector<10x1xf32>,
    %c0_24 = arith.constant 0 : index
    %c0_25 = arith.constant 0 : index
    %37 = vector.load %arg7[%c0_24, %c0_25] : memref<10x1xf32, #tpu.memory_space<vmem>>, vector<10x1xf32>
    tpu.vector_store %arg7[%c0_24, %c0_25], %24 {strides = array<i32>} : memref<10x1xf32, #tpu.memory_space<vmem>>, vector<10x1xf32>,
    %c0_i32_26 = arith.constant 0 : i32
    %38 = arith.cmpi eq, %arg1, %c0_i32_26 : i32
    %39 = arith.extui %38 : i1 to i32
    %c0_i32_27 = arith.constant 0 : i32
    %40 = arith.cmpi ne, %39, %c0_i32_27 : i32
    scf.if %40 {
      %c0_28 = arith.constant 0 : index
      %c0_29 = arith.constant 0 : index
      %41 = vector.load %arg9[%c0_28, %c0_29] : memref<10x1xf32, #tpu.memory_space<vmem>>, vector<10x1xf32>
      %c0_30 = arith.constant 0 : index
      %c0_31 = arith.constant 0 : index
      %42 = vector.load %arg7[%c0_30, %c0_31] : memref<10x1xf32, #tpu.memory_space<vmem>>, vector<10x1xf32>
      %c0_32 = arith.constant 0 : index
      %c0_33 = arith.constant 0 : index
      %43 = vector.load %arg8[%c0_32, %c0_33] : memref<10x1xf32, #tpu.memory_space<vmem>>, vector<10x1xf32>
      %44 = math.log %43 : vector<10x1xf32>
      %45 = arith.addf %42, %44 : vector<10x1xf32>
      %46 = arith.subf %41, %45 : vector<10x1xf32>
      %c0_34 = arith.constant 0 : index
      %c0_35 = arith.constant 0 : index
      %47 = vector.load %arg5[%c0_34, %c0_35] : memref<10x1xf32, #tpu.memory_space<vmem>>, vector<10x1xf32>
      tpu.vector_store %arg5[%c0_34, %c0_35], %46 {strides = array<i32>} : memref<10x1xf32, #tpu.memory_space<vmem>>, vector<10x1xf32>,
    } else {
    }
    return
  }
  func.func @transform_0(%arg0: i32, %arg1: i32) -> (i32, i32) {
    %c0_i32 = arith.constant 0 : i32
    %c0_i32_0 = arith.constant 0 : i32
    return %arg0, %c0_i32 : i32, i32
  }
  func.func @transform_1(%arg0: i32, %arg1: i32) -> (i32, i32) {
    %c0_i32 = arith.constant 0 : i32
    %c0_i32_0 = arith.constant 0 : i32
    return %c0_i32, %arg1 : i32, i32
  }
  func.func @transform_2(%arg0: i32, %arg1: i32) -> (i32, i32) {
    %c0_i32 = arith.constant 0 : i32
    %c0_i32_0 = arith.constant 0 : i32
    return %arg0, %c0_i32 : i32, i32
  }
  func.func @transform_3(%arg0: i32, %arg1: i32) -> (i32, i32) {
    %c0_i32 = arith.constant 0 : i32
    %c0_i32_0 = arith.constant 0 : i32
    return %arg0, %c0_i32 : i32, i32
  }
}

</mosaic_0001>

<llo_original>
// kernel: actor_forward.1
$region0: #{actor_forward.1}
  #allocation0 [shape = 'u32[]', space=smem, size = 0x4, offset = 0x4, fixed_abs, tag = 'smem constant byte address 0x4 - core index']
  #allocation1 [shape = 'u32[144,128]{1,0:T(1,128)}', space=vmem, size = 0x12000, scoped, tag = 'internal scratch']
  #allocation2 [shape = 's32[1,256]{1,0:T(1,128)}', space=vmem, size = 0x400, scoped, tag = 'scratch operand']
  #allocation3 [shape = 'f32[10,1]{1,0:T(8,128)}', space=vmem, size = 0x2000, scoped, tag = 'scratch operand']
  #allocation4 [shape = 'f32[10,1]{1,0:T(8,128)}', space=vmem, size = 0x2000, scoped, tag = 'scratch operand']
  #allocation5 [shape = 'f32[10,1]{1,0:T(8,128)}', space=vmem, size = 0x2000, scoped, tag = 'scratch operand']
  %s0 = inlined_call_operand.vmem [shape: bf16[10,33], index: 0, kind: input, shape index: {}]
  %s1 = inlined_call_operand.vmem [shape: bf16[33,256], index: 1, kind: input, shape index: {}]
  %s2 = inlined_call_operand.vmem [shape: s32[10,1], index: 2, kind: input, shape index: {}]
  %s3 = inlined_call_operand.vmem [shape: f32[10,1], index: 3, kind: output, shape index: {}]
  %s4 = sld [smem:[#allocation0]]
  $region30: #{actor_forward.1} parent=0
    _
  %s6 = ssub.s32 1, %s4
  %s7 = scalar_select 0, %s6, %s4
  // Predicated region
  $region2: #{actor_forward.1} parent=0 // pred_check
    _
  $region3: #{actor_forward.1} parent=0 // pred_check_branch
    %9 = sbr.rel (0) target = $region5
  $region4: #{actor_forward.1} parent=0 // pred_region
    _
  $region5: #{actor_forward.1} parent=0 // pred_fallthru
    _
  // Predicated region
  $region6: #{actor_forward.1} parent=0 // pred_check
    _
  $region7: #{actor_forward.1} parent=0 // pred_check_branch
    %11 = sbr.rel (0) target = $region9
  $region8: #{actor_forward.1} parent=0 // pred_region
    _
  $region9: #{actor_forward.1} parent=0 // pred_fallthru
    _
  // Predicated region
  $region10: #{actor_forward.1} parent=0 // pred_check
    _
  $region11: #{actor_forward.1} parent=0 // pred_check_branch
    %13 = sbr.rel (0) target = $region13
  $region12: #{actor_forward.1} parent=0 // pred_region
    _
  $region13: #{actor_forward.1} parent=0 // pred_fallthru
    _
  %p15 = scmp.eq.s32.totalorder 0, 0
  // Predicated region
  $region14: #{actor_forward.1} parent=0 // pred_check
    %p16 = pneg %p15
  $region15: #{actor_forward.1} parent=0 // pred_check_branch
    %18 = sbr.rel (%p16) target = $region17
  $region16: #{actor_forward.1} parent=0 // pred_region
    %vm19 = vcmask 7168
    %20 = vst.msk [vmem:[#allocation3] sm:$0xff] %vm19, -inf
    %vm21 = vcmask 1024
    %22 = vst.msk [vmem:[#allocation3 + $0x8] sm:$0x3] %vm21, -inf
    %23 = vst.msk [vmem:[#allocation4] sm:$0xff] %vm19, 0.0
    %24 = vst.msk [vmem:[#allocation4 + $0x8] sm:$0x3] %vm21, 0.0
    %25 = vst.msk [vmem:[#allocation5] sm:$0xff] %vm19, 0.0
    %26 = vst.msk [vmem:[#allocation5 + $0x8] sm:$0x3] %vm21, 0.0
    %v27 = vlaneseq
    %v28 = vand.u32 %v27, 127
    %v29 = vadd.s32 %v28, 128
    %v30 = vcombine.low %v28, %v29
    %v32 = vunpack.c.l.s4 1966171168
    %v33 = vunpack.c.0.s8 %v32
    %v34 = vlaneseq
    %v35 = vshrl.u32 %v34, 7
    %v36 = vsub.s32 %v33, %v35
    %v37 = vrot.slane %v30, %v36
    %v39 = vunpack.c.l.s4 1966171168
    %v40 = vunpack.c.0.s8 %v39
    %v41 = vlaneseq
    %v42 = vshrl.u32 %v41, 7
    %v43 = vsub.s32 %v40, %v42
    %v44 = vrot.slane %v37, %v43
    %v45 = vlaneseq
    %vm46 = vcmp.ge.s32.totalorder %v45, 0
    %vm47 = vcmp.lt.s32.totalorder %v45, 256
    %vm48 = vmand %vm46, %vm47
    %49 = vst.msk [vmem:[#allocation2] sm:$0x3] %vm48, %v44
  $region17: #{actor_forward.1} parent=0 // pred_fallthru
    _
  %v50 = vld [vmem:[%s0] sm:$0xf]
  %v51 = vld [vmem:[%s0 + $0x4] sm:$0x1]
  %v52 = vld [vmem:[%s1] sm:$0xff]
  %v53 = vld [vmem:[%s1 + $0x8] sm:$0xff]
  %v54 = vld [vmem:[%s1 + $0x10] sm:$0xff]
  %v55 = vld [vmem:[%s1 + $0x18] sm:$0xff]
  %v56 = vld [vmem:[%s1 + $0x20] sm:$0x11]
  %v59 = vunpack.c.l.b16 %v50
  %v60 = vunpack.c.l.b16 %v51
  %v61 = vpack.c.b16 %v60, %v59
  %v67 = vunpack.c.l.b16 %v52
  %v68 = vunpack.c.h.b16 %v52
  %v69 = vunpack.c.l.b16 %v53
  %v70 = vunpack.c.h.b16 %v53
  %v71 = vunpack.c.l.b16 %v54
  %v72 = vunpack.c.h.b16 %v54
  %v73 = vunpack.c.l.b16 %v55
  %v74 = vunpack.c.h.b16 %v55
  %v75 = vunpack.c.l.b16 %v56
  %v76 = vunpack.c.h.b16 %v56
  %v77 = vpack.c.b16 %v69, %v67
  %v78 = vpack.c.b16 %v70, %v68
  %v79 = vpack.c.b16 %v73, %v71
  %v80 = vpack.c.b16 %v74, %v72
  %v81 = vpack.c.b16 %v75, %v75
  %v82 = vpack.c.b16 %v76, %v76
  %vm87 = vcmask 269312
  %v89 = vsel %vm87, %v61, 0
  %vm91 = vcmask 1040384
  %v92 = vsel 0, 4294967295, 65535
  %v93 = vsel %vm91, %v92, 0
  %v95 = vand.u32 %v81, %v93
  %v98 = vand.u32 %v82, %v93
  %100 = vmatprep.subr.bf16.mxu0 %v78
  %101 = vmatpush1.bf16.msra.mxu0 %v77
  %102 = vmatprep.subr.bf16.mxu0 %v80
  %103 = vmatpush1.bf16.msra.mxu0 %v79
  %104 = vmatprep.subr.bf16.mxu0 %v98
  %105 = vmatpush1.bf16.msra.mxu0 %v95
  %106 = vmatprep.subr.bf16.mxu0 0
  %107 = vmatpush1.bf16.msra.mxu0 0
  %108 = vmatprep.subr.bf16.mxu0 0
  %109 = vmatpush1.bf16.msra.mxu0 0
  %110 = vmatprep.subr.bf16.mxu0 0
  %111 = vmatpush1.bf16.msra.mxu0 0
  %112 = vmatprep.subr.bf16.mxu0 0
  %113 = vmatpush1.bf16.msra.mxu0 0
  %114 = vmatprep.subr.bf16.mxu0 0
  %115 = vmatpush1.bf16.msra.mxu0 0
  %116 = vmatprep.subr.bf16.mxu0 0
  %117 = vmatpush1.bf16.msra.mxu0 0
  %118 = vmatprep.subr.bf16.mxu0 0
  %119 = vmatpush1.bf16.msra.mxu0 0
  %120 = vmatprep.subr.bf16.mxu0 0
  %121 = vmatpush1.bf16.msra.mxu0 0
  %122 = vmatprep.subr.bf16.mxu0 0
  %123 = vmatpush1.bf16.msra.mxu0 0
  %124 = vmatprep.subr.bf16.mxu0 0
  %125 = vmatpush1.bf16.msra.mxu0 0
  %126 = vmatprep.subr.bf16.mxu0 0
  %127 = vmatpush1.bf16.msra.mxu0 0
  %128 = vmatprep.subr.bf16.mxu0 0
  %129 = vmatpush1.bf16.msra.mxu0 0
  %130 = vmatprep.subr.bf16.mxu0 0
  %131 = vmatpush1.bf16.msra.mxu0 0
  %132 = vmatprep.mubr.bf16.mxu0 0
  %133 = vmatmul.mubr.bf16.gmra.mrb[0].mxu0 %v89
  %v134 = vpop.f32.mrb[0].mxu0
  %v135 = vadd.f32 0.0, %v134
  %v136 = vpop.f32.mrb[0].mxu0
  %v137 = vadd.f32 0.0, %v136
  %v138 = vpop.f32.mrb[0].mxu0
  %v139 = vadd.f32 0.0, %v138
  %v140 = vpop.f32.mrb[0].mxu0
  %v141 = vadd.f32 0.0, %v140
  %142 = vdwg.mxu0
  %v143 = vld [vmem:[%s2] sm:$0xff]
  %v144 = vld [vmem:[%s2 + $0x8] sm:$0x3]
  %s145 = smul.u32 0, 256
  %v146 = vstv %s145
  %v147 = vsub.s32 %v143, %v146
  %v148 = vsub.s32 %v144, %v146
  %v149 = vld [vmem:[#allocation2] sm:$0x3]
  %v150 = vlaneseq
  %v151 = vshrl.u32 %v150, 7
  %v152 = vsub.s32 0, %v151
  %v153 = vrot.slane %v149, %v152
  %v154 = vlaneseq
  %v155 = vshrl.u32 %v154, 7
  %v156 = vsub.s32 1, %v155
  %v157 = vrot.slane %v149, %v156
  %158 = vset.pattern.permute.xlu0 0
  %159 = vperm.xlu0 %158, %v147
  %v160 = vpop.permute.xlu0 %159
  %161 = vset.pattern.permute.xlu0 0
  %162 = vperm.xlu0 %161, %v148
  %v163 = vpop.permute.xlu0 %162
  %vm164 = vcmp.eq.s32.totalorder %v153, %v160
  %vm165 = vcmp.eq.s32.totalorder %v157, %v160
  %vm166 = vcmp.eq.s32.totalorder %v153, %v163
  %vm167 = vcmp.eq.s32.totalorder %v157, %v163
  %v168 = vld [vmem:[#allocation5] sm:$0xff]
  %v169 = vld [vmem:[#allocation5 + $0x8] sm:$0x3]
  %v170 = vsel %vm164, %v135, 0.0
  %v171 = vsel %vm165, %v137, 0.0
  %v172 = vsel %vm166, %v139, 0.0
  %v173 = vsel %vm167, %v141, 0.0
  %v174 = vadd.f32 %v170, %v171
  %175 = vadd.xlane.f32.xlu0 %v174
  %v176 = vpop.xlane.xlu0 %175
  %vm177 = vcmask 1041408
  %v178 = vsel %vm177, %v172, 0.0
  %v179 = vsel %vm177, %v173, 0.0
  %v180 = vadd.f32 %v178, %v179
  %181 = vadd.xlane.f32.xlu0 %v180
  %v182 = vpop.xlane.xlu0 %181
  %v183 = vadd.f32 %v168, %v176
  %v184 = vadd.f32 %v169, %v182
  %vm185 = vcmask 7168
  %186 = vst.msk [vmem:[#allocation5] sm:$0xff] %vm185, %v183
  %vm187 = vcmask 1024
  %188 = vst.msk [vmem:[#allocation5 + $0x8] sm:$0x3] %vm187, %v184
  %v189 = vld [vmem:[#allocation3] sm:$0xff]
  %v190 = vld [vmem:[#allocation3 + $0x8] sm:$0x3]
  %v191 = vmax.f32 %v135, %v137
  %192 = vmax.xlane.f32.xlu0 %v191
  %v193 = vpop.xlane.xlu0 %192
  %v194 = vsel %vm177, %v139, -inf
  %v195 = vsel %vm177, %v141, -inf
  %v196 = vmax.f32 %v194, %v195
  %197 = vmax.xlane.f32.xlu0 %v196
  %v198 = vpop.xlane.xlu0 %197
  %v199 = vmax.f32 %v189, %v193
  %v200 = vmax.f32 %v190, %v198
  %v201 = vsub.f32 %v189, %v199
  %v202 = vsub.f32 %v190, %v200
  %v203 = vmul.f32 %v201, 1.442695
  %v204 = vpow.pop %v203
  %v205 = vmul.f32 %v202, 1.442695
  %v206 = vpow.pop %v205
  %v207 = vld [vmem:[#allocation4] sm:$0xff]
  %v208 = vld [vmem:[#allocation4 + $0x8] sm:$0x3]
  %v209 = vmul.f32 %v204, %v207
  %v210 = vmul.f32 %v206, %v208
  %212 = vset.pattern.permute.xlu0 0
  %213 = vperm.xlu0 %212, %v199
  %v214 = vpop.permute.xlu0 %213
  %217 = vset.pattern.permute.xlu0 0
  %218 = vperm.xlu0 %217, %v200
  %v219 = vpop.permute.xlu0 %218
  %v221 = vsub.f32 %v135, %v214
  %v222 = vsub.f32 %v137, %v214
  %v223 = vsub.f32 %v139, %v219
  %v224 = vsub.f32 %v141, %v219
  %v225 = vmul.f32 %v221, 1.442695
  %v226 = vpow.pop %v225
  %v227 = vmul.f32 %v222, 1.442695
  %v228 = vpow.pop %v227
  %v229 = vmul.f32 %v223, 1.442695
  %v230 = vpow.pop %v229
  %v231 = vmul.f32 %v224, 1.442695
  %v232 = vpow.pop %v231
  %v233 = vadd.f32 %v226, %v228
  %234 = vadd.xlane.f32.xlu0 %v233
  %v235 = vpop.xlane.xlu0 %234
  %v236 = vsel %vm177, %v230, 0.0
  %v237 = vsel %vm177, %v232, 0.0
  %v238 = vadd.f32 %v236, %v237
  %239 = vadd.xlane.f32.xlu0 %v238
  %v240 = vpop.xlane.xlu0 %239
  %v241 = vadd.f32 %v209, %v235
  %v242 = vadd.f32 %v210, %v240
  %243 = vst.msk [vmem:[#allocation4] sm:$0xff] %vm185, %v241
  %244 = vst.msk [vmem:[#allocation4 + $0x8] sm:$0x3] %vm187, %v242
  %245 = vst.msk [vmem:[#allocation3] sm:$0xff] %vm185, %v199
  %246 = vst.msk [vmem:[#allocation3 + $0x8] sm:$0x3] %vm187, %v200
  // Predicated region
  $region18: #{actor_forward.1} parent=0 // pred_check
    %p247 = pneg %p15
  $region19: #{actor_forward.1} parent=0 // pred_check_branch
    %249 = sbr.rel (%p247) target = $region21
  $region20: #{actor_forward.1} parent=0 // pred_region
    %v250 = vld [vmem:[#allocation5] sm:$0xff]
    %v251 = vld [vmem:[#allocation5 + $0x8] sm:$0x3]
    %v252 = vld [vmem:[#allocation3] sm:$0xff]
    %v253 = vld [vmem:[#allocation3 + $0x8] sm:$0x3]
    %v254 = vld [vmem:[#allocation4] sm:$0xff]
    %v255 = vld [vmem:[#allocation4 + $0x8] sm:$0x3]
    %v256 = vlog2.pop %v254
    %v257 = vmul.f32 %v256, 0.6931472
    %v258 = vlog2.pop %v255
    %v259 = vmul.f32 %v258, 0.6931472
    %v260 = vadd.f32 %v252, %v257
    %v261 = vadd.f32 %v253, %v259
    %v262 = vsub.f32 %v250, %v260
    %v263 = vsub.f32 %v251, %v261
    %264 = vst.msk [vmem:[%s3] sm:$0xff] %vm185, %v262
    %265 = vst.msk [vmem:[%s3 + $0x8] sm:$0x3] %vm187, %v263
  $region21: #{actor_forward.1} parent=0 // pred_fallthru
    _
  // Predicated region
  $region22: #{actor_forward.1} parent=0 // pred_check
    _
  $region23: #{actor_forward.1} parent=0 // pred_check_branch
    %267 = sbr.rel (0) target = $region25
  $region24: #{actor_forward.1} parent=0 // pred_region
    _
  $region25: #{actor_forward.1} parent=0 // pred_fallthru
    _
  // Predicated region
  $region26: #{actor_forward.1} parent=0 // pred_check
    _
  $region27: #{actor_forward.1} parent=0 // pred_check_branch
    %269 = sbr.rel (0) target = $region29
  $region28: #{actor_forward.1} parent=0 // pred_region
    _
  $region29: #{actor_forward.1} parent=0 // pred_fallthru
    _

</llo_original>
